<compile_context>
chip_gen: v5e
topology: v5e:2x2
jax: 0.10.0
libtpu: 0.0.40
codegen_flags: <defaults>
</compile_context>

<pallas_src>
import functools

import jax
import jax.numpy as jnp
import numpy as np
from jax import lax
from jax.experimental import pallas as pl
from jax.experimental.pallas import tpu as pltpu

_SUB = 8  # f32 sublane count: recurrence is unrolled in groups of 8 so every
          # z load / hidden store is a dense (8, 128) tile.


def _round_up(n, m):
    return ((n + m - 1) // m) * m


def _rnn_kernel(x_ref, wx_t_ref, wh_t_ref, wy_t_ref, bh_ref, by_ref,
                h_out_ref, y_out_ref, z_scr, h_all_scr, *, seq_len):
    Sp = x_ref.shape[0]          # sequence length, padded to a multiple of 8
    Hp = wh_t_ref.shape[0]       # hidden dim, padded to a multiple of 128
    n_chunks = Sp // _SUB

    # --- Phase 1: hoisted input projection for ALL timesteps (one MXU matmul).
    z_scr[...] = (jnp.dot(x_ref[...], wx_t_ref[...],
                          preferred_element_type=jnp.float32) + bh_ref[...])

    # --- Phase 2: the truly sequential recurrence.
    # At Hp=128 this pins 16 of 64 vregs for the whole loop (fine); at Hp>=256
    # prefer reading from the ref per step or MXU weight-register residency.
    wh = wh_t_ref[...]
    # TODO(synk): hold W_h in the MXU weight registers across steps via
    # pltpu.matmul_push_rhs / matmul_acc_lhs / matmul_pop (biggest remaining win on
    # the serial path) once the per-step accumulator-reset semantics are verified;
    # jnp.dot currently re-streams the (Hp,Hp) RHS every step.

    def chunk_body(c, h_prev):
        base = pl.multiple_of(c * _SUB, _SUB)
        z_chunk = z_scr[pl.ds(base, _SUB), :]          # one dense (8, Hp) load
        h = h_prev
        rows = []
        for j in range(_SUB):                          # static unroll (LLO visibility)
            h = jnp.tanh(jnp.dot(h, wh, preferred_element_type=jnp.float32)
                         + z_chunk[j:j + 1, :])
            rows.append(h)
        # One lane+sublane-dense (8, Hp) unmasked store per chunk.
        h_all_scr[pl.ds(base, _SUB), :] = jnp.concatenate(rows, axis=0)
        return h

    h0 = jnp.zeros((1, Hp), jnp.float32)
    h_last = lax.fori_loop(0, n_chunks, chunk_body, h0, unroll=True)

    if seq_len % _SUB == 0:
        h_out_ref[...] = h_last                        # final state == last real step
    else:
        h_out_ref[...] = h_all_scr[pl.ds(seq_len - 1, 1), :]

    # --- Phase 3: batched readout + numerically-stable softmax over all steps.
    logits = (jnp.dot(h_all_scr[...], wy_t_ref[...],
                      preferred_element_type=jnp.float32) + by_ref[...])
    m = jnp.max(logits, axis=-1, keepdims=True)
    e = jnp.exp(logits - m)
    denom = jnp.sum(e, axis=-1, keepdims=True)
    # approx reciprocal -> EUP slot (already busy with exp); frees VPU divide cycles.
    y_out_ref[...] = e * pl.reciprocal(denom, approx=True)


def prepare_rnn_params(W_h, W_x, W_y, B_h, B_y):
    """Pad / transpose the weights ONCE (hoisted out of the per-call path)."""
    f32 = jnp.float32
    H, E = W_x.shape
    Hp, Ep = _round_up(H, 128), _round_up(E, 128)
    return {
        # pre-transposed to (in, out) so every kernel matmul is row-vector @ matrix
        "WxT": jnp.zeros((Ep, Hp), f32).at[:E, :H].set(jnp.asarray(W_x, f32).T),
        "WhT": jnp.zeros((Hp, Hp), f32).at[:H, :H].set(jnp.asarray(W_h, f32).T),
        "WyT": jnp.zeros((Hp, Ep), f32).at[:H, :E].set(jnp.asarray(W_y, f32).T),
        "Bh": jnp.zeros((1, Hp), f32).at[0, :H].set(jnp.asarray(B_h, f32)),
        # padded logit lanes get a huge negative bias -> exp() underflows to 0
        "By": jnp.full((1, Ep), -1e30, f32).at[0, :E].set(jnp.asarray(B_y, f32)),
    }


@functools.partial(jax.jit, static_argnames=("hidden_dim",))
def rnn_forward(x, params, *, hidden_dim):
    f32 = jnp.float32
    S, E = x.shape
    H = hidden_dim
    Ep = params["WxT"].shape[0]
    Hp = params["WhT"].shape[0]
    Sp = _round_up(S, _SUB)

    xp = jnp.zeros((Sp, Ep), f32).at[:S, :E].set(x.astype(f32))

    kernel = functools.partial(_rnn_kernel, seq_len=S)
    h_pad, y_pad = pl.pallas_call(
        kernel,
        out_shape=(jax.ShapeDtypeStruct((1, Hp), f32),    # final hidden state
                   jax.ShapeDtypeStruct((Sp, Ep), f32)),  # stacked softmax outputs
        scratch_shapes=[pltpu.VMEM((Sp, Hp), f32),   # Z = X @ Wx^T + Bh (all steps)
                        pltpu.VMEM((Sp, Hp), f32)],  # stacked hidden states
    )(xp, params["WxT"], params["WhT"], params["WyT"], params["Bh"], params["By"])

    return h_pad[0, :H], y_pad[:S, :E]


def rnn_ref(x, W_h, W_x, W_y, B_h, B_y):
    """Pure-JAX reference reproducing the PyTorch forward."""
    H = W_h.shape[0]
    h = jnp.zeros((H,), jnp.float32)
    outs = []
    for i in range(x.shape[0]):
        h = jnp.tanh(W_h @ h + W_x @ x[i] + B_h)
        outs.append(jax.nn.softmax(W_y @ h + B_y))
    return h, jnp.stack(outs)


if __name__ == "__main__":
    seq_len, embed_dim, hidden_dim = 8, 16, 32

    key = jax.random.PRNGKey(0)
    k1, k2, k3, k4, k5, kx = jax.random.split(key, 6)
    # torch.rand -> uniform[0, 1) parameters
    W_h = jax.random.uniform(k1, (hidden_dim, hidden_dim), jnp.float32)
    W_x = jax.random.uniform(k2, (hidden_dim, embed_dim), jnp.float32)
    W_y = jax.random.uniform(k3, (embed_dim, hidden_dim), jnp.float32)
    B_h = jax.random.uniform(k4, (hidden_dim,), jnp.float32)
    B_y = jax.random.uniform(k5, (embed_dim,), jnp.float32)
    x = jax.random.normal(kx, (seq_len, embed_dim), jnp.float32)

    params = prepare_rnn_params(W_h, W_x, W_y, B_h, B_y)   # one-time, off hot path
    h, y = rnn_forward(x, params, hidden_dim=hidden_dim)
    h = jax.block_until_ready(h)
    y = jax.block_until_ready(y)

    h_ref, y_ref = rnn_ref(x, W_h, W_x, W_y, B_h, B_y)
    np.testing.assert_allclose(np.asarray(h), np.asarray(h_ref), rtol=1e-4, atol=1e-5)
    # y uses the EUP approximate reciprocal for the softmax normalization.
    np.testing.assert_allclose(np.asarray(y), np.asarray(y_ref), rtol=2e-3, atol=2e-3)
    print("KERNEL_OK")
</pallas_src>

<mosaic_0001>
module attributes {stable_mosaic.version = 11 : i64} {
  func.func @_rnn_kernel(%arg0: memref<8x128xf32, #tpu.memory_space<vmem>>, %arg1: memref<128x128xf32, #tpu.memory_space<vmem>>, %arg2: memref<128x128xf32, #tpu.memory_space<vmem>>, %arg3: memref<128x128xf32, #tpu.memory_space<vmem>>, %arg4: memref<1x128xf32, #tpu.memory_space<vmem>>, %arg5: memref<1x128xf32, #tpu.memory_space<vmem>>, %arg6: memref<1x128xf32, #tpu.memory_space<vmem>>, %arg7: memref<8x128xf32, #tpu.memory_space<vmem>>, %arg8: memref<8x128xf32, #tpu.memory_space<vmem>>, %arg9: memref<8x128xf32, #tpu.memory_space<vmem>>) attributes {dimension_semantics = [], scalar_prefetch = 0 : i64, scratch_operands = 2 : i64, tpu.core_type = #tpu.core_type<tc>} {
    %c0 = arith.constant 0 : index
    %c0_0 = arith.constant 0 : index
    %0 = vector.load %arg0[%c0, %c0_0] : memref<8x128xf32, #tpu.memory_space<vmem>>, vector<8x128xf32>
    %c0_1 = arith.constant 0 : index
    %c0_2 = arith.constant 0 : index
    %1 = vector.load %arg1[%c0_1, %c0_2] : memref<128x128xf32, #tpu.memory_space<vmem>>, vector<128x128xf32>
    %cst = arith.constant dense<0.000000e+00> : vector<8x128xf32>
    %2 = tpu.matmul %0, %1, %cst {dimension_numbers = #tpu.dot_dimension_numbers<[1], [0], [0], [1], [0, 0, 1, 1], [], []>} : vector<8x128xf32>, vector<128x128xf32>, vector<8x128xf32> -> vector<8x128xf32>
    %c0_3 = arith.constant 0 : index
    %c0_4 = arith.constant 0 : index
    %3 = vector.load %arg4[%c0_3, %c0_4] : memref<1x128xf32, #tpu.memory_space<vmem>>, vector<1x128xf32>
    %4 = vector.broadcast %3 : vector<1x128xf32> to vector<8x128xf32>
    %5 = arith.addf %2, %4 : vector<8x128xf32>
    %c0_5 = arith.constant 0 : index
    %c0_6 = arith.constant 0 : index
    %6 = vector.load %arg8[%c0_5, %c0_6] : memref<8x128xf32, #tpu.memory_space<vmem>>, vector<8x128xf32>
    tpu.vector_store %arg8[%c0_5, %c0_6], %5 {strides = array<i32>} : memref<8x128xf32, #tpu.memory_space<vmem>>, vector<8x128xf32>,
    %c0_7 = arith.constant 0 : index
    %c0_8 = arith.constant 0 : index
    %7 = vector.load %arg2[%c0_7, %c0_8] : memref<128x128xf32, #tpu.memory_space<vmem>>, vector<128x128xf32>
    %cst_9 = arith.constant 0.000000e+00 : f32
    %8 = vector.broadcast %cst_9 : f32 to vector<1x128xf32>
    %c0_i32 = arith.constant 0 : i32
    %c8_i32 = arith.constant 8 : i32
    %9 = arith.muli %c0_i32, %c8_i32 : i32
    %10 = tpu.assume_multiple %9, 8 : i32
    %11 = arith.index_cast %10 : i32 to index
    %c0_10 = arith.constant 0 : index
    %12 = vector.load %arg8[%11, %c0_10] : memref<8x128xf32, #tpu.memory_space<vmem>>, vector<8x128xf32>
    %cst_11 = arith.constant dense<0.000000e+00> : vector<1x128xf32>
    %13 = tpu.matmul %8, %7, %cst_11 {dimension_numbers = #tpu.dot_dimension_numbers<[1], [0], [0], [1], [0, 0, 1, 1], [], []>} : vector<1x128xf32>, vector<128x128xf32>, vector<1x128xf32> -> vector<1x128xf32>
    %14 = vector.extract_strided_slice %12 {offsets = [0, 0], sizes = [1, 128], strides = [1, 1]} : vector<8x128xf32> to vector<1x128xf32>
    %15 = arith.addf %13, %14 : vector<1x128xf32>
    %16 = math.tanh %15 : vector<1x128xf32>
    %cst_12 = arith.constant dense<0.000000e+00> : vector<1x128xf32>
    %17 = tpu.matmul %16, %7, %cst_12 {dimension_numbers = #tpu.dot_dimension_numbers<[1], [0], [0], [1], [0, 0, 1, 1], [], []>} : vector<1x128xf32>, vector<128x128xf32>, vector<1x128xf32> -> vector<1x128xf32>
    %18 = vector.extract_strided_slice %12 {offsets = [1, 0], sizes = [1, 128], strides = [1, 1]} : vector<8x128xf32> to vector<1x128xf32>
    %19 = arith.addf %17, %18 : vector<1x128xf32>
    %20 = math.tanh %19 : vector<1x128xf32>
    %cst_13 = arith.constant dense<0.000000e+00> : vector<1x128xf32>
    %21 = tpu.matmul %20, %7, %cst_13 {dimension_numbers = #tpu.dot_dimension_numbers<[1], [0], [0], [1], [0, 0, 1, 1], [], []>} : vector<1x128xf32>, vector<128x128xf32>, vector<1x128xf32> -> vector<1x128xf32>
    %22 = vector.extract_strided_slice %12 {offsets = [2, 0], sizes = [1, 128], strides = [1, 1]} : vector<8x128xf32> to vector<1x128xf32>
    %23 = arith.addf %21, %22 : vector<1x128xf32>
    %24 = math.tanh %23 : vector<1x128xf32>
    %cst_14 = arith.constant dense<0.000000e+00> : vector<1x128xf32>
    %25 = tpu.matmul %24, %7, %cst_14 {dimension_numbers = #tpu.dot_dimension_numbers<[1], [0], [0], [1], [0, 0, 1, 1], [], []>} : vector<1x128xf32>, vector<128x128xf32>, vector<1x128xf32> -> vector<1x128xf32>
    %26 = vector.extract_strided_slice %12 {offsets = [3, 0], sizes = [1, 128], strides = [1, 1]} : vector<8x128xf32> to vector<1x128xf32>
    %27 = arith.addf %25, %26 : vector<1x128xf32>
    %28 = math.tanh %27 : vector<1x128xf32>
    %cst_15 = arith.constant dense<0.000000e+00> : vector<1x128xf32>
    %29 = tpu.matmul %28, %7, %cst_15 {dimension_numbers = #tpu.dot_dimension_numbers<[1], [0], [0], [1], [0, 0, 1, 1], [], []>} : vector<1x128xf32>, vector<128x128xf32>, vector<1x128xf32> -> vector<1x128xf32>
    %30 = vector.extract_strided_slice %12 {offsets = [4, 0], sizes = [1, 128], strides = [1, 1]} : vector<8x128xf32> to vector<1x128xf32>
    %31 = arith.addf %29, %30 : vector<1x128xf32>
    %32 = math.tanh %31 : vector<1x128xf32>
    %cst_16 = arith.constant dense<0.000000e+00> : vector<1x128xf32>
    %33 = tpu.matmul %32, %7, %cst_16 {dimension_numbers = #tpu.dot_dimension_numbers<[1], [0], [0], [1], [0, 0, 1, 1], [], []>} : vector<1x128xf32>, vector<128x128xf32>, vector<1x128xf32> -> vector<1x128xf32>
    %34 = vector.extract_strided_slice %12 {offsets = [5, 0], sizes = [1, 128], strides = [1, 1]} : vector<8x128xf32> to vector<1x128xf32>
    %35 = arith.addf %33, %34 : vector<1x128xf32>
    %36 = math.tanh %35 : vector<1x128xf32>
    %cst_17 = arith.constant dense<0.000000e+00> : vector<1x128xf32>
    %37 = tpu.matmul %36, %7, %cst_17 {dimension_numbers = #tpu.dot_dimension_numbers<[1], [0], [0], [1], [0, 0, 1, 1], [], []>} : vector<1x128xf32>, vector<128x128xf32>, vector<1x128xf32> -> vector<1x128xf32>
    %38 = vector.extract_strided_slice %12 {offsets = [6, 0], sizes = [1, 128], strides = [1, 1]} : vector<8x128xf32> to vector<1x128xf32>
    %39 = arith.addf %37, %38 : vector<1x128xf32>
    %40 = math.tanh %39 : vector<1x128xf32>
    %cst_18 = arith.constant dense<0.000000e+00> : vector<1x128xf32>
    %41 = tpu.matmul %40, %7, %cst_18 {dimension_numbers = #tpu.dot_dimension_numbers<[1], [0], [0], [1], [0, 0, 1, 1], [], []>} : vector<1x128xf32>, vector<128x128xf32>, vector<1x128xf32> -> vector<1x128xf32>
    %42 = vector.extract_strided_slice %12 {offsets = [7, 0], sizes = [1, 128], strides = [1, 1]} : vector<8x128xf32> to vector<1x128xf32>
    %43 = arith.addf %41, %42 : vector<1x128xf32>
    %44 = math.tanh %43 : vector<1x128xf32>
    %45 = tpu.concatenate %16, %20, %24, %28, %32, %36, %40, %44 in 0 : vector<1x128xf32>, vector<1x128xf32>, vector<1x128xf32>, vector<1x128xf32>, vector<1x128xf32>, vector<1x128xf32>, vector<1x128xf32>, vector<1x128xf32> -> vector<8x128xf32>
    %46 = arith.index_cast %10 : i32 to index
    %c0_19 = arith.constant 0 : index
    %47 = vector.load %arg9[%46, %c0_19] : memref<8x128xf32, #tpu.memory_space<vmem>>, vector<8x128xf32>
    tpu.vector_store %arg9[%46, %c0_19], %45 {strides = array<i32>} : memref<8x128xf32, #tpu.memory_space<vmem>>, vector<8x128xf32>,
    %c1_i32 = arith.constant 1 : i32
    %c0_20 = arith.constant 0 : index
    %c0_21 = arith.constant 0 : index
    %48 = vector.load %arg6[%c0_20, %c0_21] : memref<1x128xf32, #tpu.memory_space<vmem>>, vector<1x128xf32>
    tpu.vector_store %arg6[%c0_20, %c0_21], %44 {strides = array<i32>} : memref<1x128xf32, #tpu.memory_space<vmem>>, vector<1x128xf32>,
    %c0_22 = arith.constant 0 : index
    %c0_23 = arith.constant 0 : index
    %49 = vector.load %arg9[%c0_22, %c0_23] : memref<8x128xf32, #tpu.memory_space<vmem>>, vector<8x128xf32>
    %c0_24 = arith.constant 0 : index
    %c0_25 = arith.constant 0 : index
    %50 = vector.load %arg3[%c0_24, %c0_25] : memref<128x128xf32, #tpu.memory_space<vmem>>, vector<128x128xf32>
    %cst_26 = arith.constant dense<0.000000e+00> : vector<8x128xf32>
    %51 = tpu.matmul %49, %50, %cst_26 {dimension_numbers = #tpu.dot_dimension_numbers<[1], [0], [0], [1], [0, 0, 1, 1], [], []>} : vector<8x128xf32>, vector<128x128xf32>, vector<8x128xf32> -> vector<8x128xf32>
    %c0_27 = arith.constant 0 : index
    %c0_28 = arith.constant 0 : index
    %52 = vector.load %arg5[%c0_27, %c0_28] : memref<1x128xf32, #tpu.memory_space<vmem>>, vector<1x128xf32>
    %53 = vector.broadcast %52 : vector<1x128xf32> to vector<8x128xf32>
    %54 = arith.addf %51, %53 : vector<8x128xf32>
    %cst_29 = arith.constant dense<0xFF800000> : vector<8xf32>
    %55 = vector.multi_reduction <maximumf>, %54, %cst_29 [1] : vector<8x128xf32> to vector<8xf32>
    %56 = vector.shape_cast %55 : vector<8xf32> to vector<8x1xf32>
    %57 = vector.broadcast %56 : vector<8x1xf32> to vector<8x128xf32>
    %58 = arith.subf %54, %57 : vector<8x128xf32>
    %59 = math.exp %58 : vector<8x128xf32>
    %cst_30 = arith.constant dense<0.000000e+00> : vector<8xf32>
    %60 = vector.multi_reduction <add>, %59, %cst_30 [1] : vector<8x128xf32> to vector<8xf32>
    %61 = vector.shape_cast %60 : vector<8xf32> to vector<8x1xf32>
    %62 = tpu.reciprocal %61 {approx = true} : vector<8x1xf32> -> vector<8x1xf32>
    %63 = vector.broadcast %62 : vector<8x1xf32> to vector<8x128xf32>
    %64 = arith.mulf %59, %63 : vector<8x128xf32>
    %c0_31 = arith.constant 0 : index
    %c0_32 = arith.constant 0 : index
    %65 = vector.load %arg7[%c0_31, %c0_32] : memref<8x128xf32, #tpu.memory_space<vmem>>, vector<8x128xf32>
    tpu.vector_store %arg7[%c0_31, %c0_32], %64 {strides = array<i32>} : memref<8x128xf32, #tpu.memory_space<vmem>>, vector<8x128xf32>,
    return
  }
}

</mosaic_0001>

<llo_original>
// kernel: rnn_forward.1
$region0: #{rnn_forward.1}
  #allocation0 [shape = 'u32[]', space=smem, size = 0x4, offset = 0x4, fixed_abs, tag = 'smem constant byte address 0x4 - core index']
  #allocation1 [shape = 'u32[72,128]{1,0:T(1,128)}', space=vmem, size = 0x9000, scoped, tag = 'internal scratch']
  #allocation2 [shape = 'f32[8,128]{1,0:T(8,128)}', space=vmem, size = 0x1000, scoped, tag = 'scratch operand']
  #allocation3 [shape = 'f32[8,128]{1,0:T(8,128)}', space=vmem, size = 0x1000, scoped, tag = 'scratch operand']
  %s0 = inlined_call_operand.vmem [shape: f32[8,128], index: 0, kind: input, shape index: {}]
  %s1 = inlined_call_operand.hbm [shape: f32[128,128], index: 1, kind: input, shape index: {}]
  %s2 = inlined_call_operand.hbm [shape: f32[128,128], index: 2, kind: input, shape index: {}]
  %s3 = inlined_call_operand.hbm [shape: f32[128,128], index: 3, kind: input, shape index: {}]
  %s4 = inlined_call_operand.vmem [shape: f32[1,128], index: 4, kind: input, shape index: {}]
  %s5 = inlined_call_operand.vmem [shape: f32[1,128], index: 5, kind: input, shape index: {}]
  %s6 = inlined_call_operand.vmem [shape: f32[1,128], index: 6, kind: output, shape index: {0}]
  %s7 = inlined_call_operand.hbm [shape: f32[8,128], index: 7, kind: output, shape index: {1}]
  %8 = xla_tuple %s6, %s7
  %s9 = sld [smem:[#allocation0]]
  $region54: #{rnn_forward.1} parent=0
    _
  %s11 = ssub.s32 1, %s9
  %s12 = scalar_select 0, %s11, %s9
  $region1: #{rnn_forward.1} parent=0
    #allocation4 [shape = 'u8[65536]{0}', space=vmem, size = 0x10000, scoped, tag = 'input window, operand 1, single buffered']
    #allocation5 [shape = 's32[1]{0}', space=sflag, size = 0x4, scoped, tag = 'scoped memory for rnn_forward.1']
    #allocation6 [shape = 's32[1]{0}', space=sflag, size = 0x4, scoped, tag = 'scoped memory for rnn_forward.1']
    #allocation7 [shape = 'u8[65536]{0}', space=vmem, size = 0x10000, scoped, tag = 'input window, operand 2, single buffered']
    #allocation8 [shape = 's32[1]{0}', space=sflag, size = 0x4, scoped, tag = 'scoped memory for rnn_forward.1']
    #allocation9 [shape = 'u8[65536]{0}', space=vmem, size = 0x10000, scoped, tag = 'input window, operand 3, single buffered']
    #allocation10 [shape = 'u8[4096]{0}', space=vmem, size = 0x1000, scoped, tag = 'output window, operand 1, single buffered']
    %13 = vsyncpa [#allocation5], 0
    %14 = vsyncpa [#allocation8], 0
    %15 = vsyncpa [#allocation6], 0
    // Predicated region
    $region2: #{rnn_forward.1} parent=1 // pred_check
      _
    $region3: #{rnn_forward.1} parent=1 // pred_check_branch
      %17 = sbr.rel (0) target = $region5
    $region4: #{rnn_forward.1} parent=1 // pred_region
      _
    $region5: #{rnn_forward.1} parent=1 // pred_fallthru
      _
    // Predicated region
    $region6: #{rnn_forward.1} parent=1 // pred_check
      _
    $region7: #{rnn_forward.1} parent=1 // pred_check_branch
      %19 = sbr.rel (0) target = $region9
    $region8: #{rnn_forward.1} parent=1 // pred_region
      %21 = vsyncadd [#allocation5], 0
      %s22 = sshll.u32 %s1, 4
      %s23 = int_to_ptr.hbm [resolvable:$true] %s22
      %s24 = sshll.u32 [#allocation4], 4
      %s25 = int_to_ptr.vmem [resolvable:$true] %s24
      %30 = dma.hbm_to_vmem [thread:$0]  %s23, 2048, %s25, [#allocation5], 128, 128, 8
    $region9: #{rnn_forward.1} parent=1 // pred_fallthru
      _
    // Predicated region
    $region10: #{rnn_forward.1} parent=1 // pred_check
      _
    $region11: #{rnn_forward.1} parent=1 // pred_check_branch
      %32 = sbr.rel (0) target = $region13
    $region12: #{rnn_forward.1} parent=1 // pred_region
      %34 = vsyncadd [#allocation8], 0
      %s35 = sshll.u32 %s2, 4
      %s36 = int_to_ptr.hbm [resolvable:$true] %s35
      %s37 = sshll.u32 [#allocation7], 4
      %s38 = int_to_ptr.vmem [resolvable:$true] %s37
      %43 = dma.hbm_to_vmem [thread:$0]  %s36, 2048, %s38, [#allocation8], 128, 128, 8
    $region13: #{rnn_forward.1} parent=1 // pred_fallthru
      _
    // Predicated region
    $region14: #{rnn_forward.1} parent=1 // pred_check
      _
    $region15: #{rnn_forward.1} parent=1 // pred_check_branch
      %45 = sbr.rel (0) target = $region17
    $region16: #{rnn_forward.1} parent=1 // pred_region
      %47 = vsyncadd [#allocation8], 0
      %s48 = sshll.u32 %s3, 4
      %s49 = int_to_ptr.hbm [resolvable:$true] %s48
      %s50 = sshll.u32 [#allocation9], 4
      %s51 = int_to_ptr.vmem [resolvable:$true] %s50
      %56 = dma.hbm_to_vmem [thread:$0]  %s49, 2048, %s51, [#allocation8], 128, 128, 8
    $region17: #{rnn_forward.1} parent=1 // pred_fallthru
      _
    // Predicated region
    $region18: #{rnn_forward.1} parent=1 // pred_check
      _
    $region19: #{rnn_forward.1} parent=1 // pred_check_branch
      %58 = sbr.rel (0) target = $region21
    $region20: #{rnn_forward.1} parent=1 // pred_region
      _
    $region21: #{rnn_forward.1} parent=1 // pred_fallthru
      _
    // Predicated region
    $region22: #{rnn_forward.1} parent=1 // pred_check
      _
    $region23: #{rnn_forward.1} parent=1 // pred_check_branch
      %60 = sbr.rel (0) target = $region25
    $region24: #{rnn_forward.1} parent=1 // pred_region
      _
    $region25: #{rnn_forward.1} parent=1 // pred_fallthru
      _
    // Predicated region
    $region26: #{rnn_forward.1} parent=1 // pred_check
      _
    $region27: #{rnn_forward.1} parent=1 // pred_check_branch
      %62 = sbr.rel (0) target = $region29
    $region28: #{rnn_forward.1} parent=1 // pred_region
      %64 = dma.done [#allocation5], 2048
    $region29: #{rnn_forward.1} parent=1 // pred_fallthru
      _
    // Predicated region
    $region30: #{rnn_forward.1} parent=1 // pred_check
      _
    $region31: #{rnn_forward.1} parent=1 // pred_check_branch
      %66 = sbr.rel (0) target = $region33
    $region32: #{rnn_forward.1} parent=1 // pred_region
      %68 = dma.done [#allocation8], 2048
    $region33: #{rnn_forward.1} parent=1 // pred_fallthru
      _
    // Predicated region
    $region34: #{rnn_forward.1} parent=1 // pred_check
      _
    $region35: #{rnn_forward.1} parent=1 // pred_check_branch
      %70 = sbr.rel (0) target = $region37
    $region36: #{rnn_forward.1} parent=1 // pred_region
      %72 = dma.done [#allocation8], 2048
    $region37: #{rnn_forward.1} parent=1 // pred_fallthru
      _
    %v73 = vld [vmem:[%s0] sm:$0xff]
    %v74 = vld [vmem:[#allocation4] sm:$0xff]
    %v75 = vld [vmem:[#allocation4 + $0x8] sm:$0xff]
    %v76 = vld [vmem:[#allocation4 + $0x10] sm:$0xff]
    %v77 = vld [vmem:[#allocation4 + $0x18] sm:$0xff]
    %v78 = vld [vmem:[#allocation4 + $0x20] sm:$0xff]
    %v79 = vld [vmem:[#allocation4 + $0x28] sm:$0xff]
    %v80 = vld [vmem:[#allocation4 + $0x30] sm:$0xff]
    %v81 = vld [vmem:[#allocation4 + $0x38] sm:$0xff]
    %v82 = vld [vmem:[#allocation4 + $0x40] sm:$0xff]
    %v83 = vld [vmem:[#allocation4 + $0x48] sm:$0xff]
    %v84 = vld [vmem:[#allocation4 + $0x50] sm:$0xff]
    %v85 = vld [vmem:[#allocation4 + $0x58] sm:$0xff]
    %v86 = vld [vmem:[#allocation4 + $0x60] sm:$0xff]
    %v87 = vld [vmem:[#allocation4 + $0x68] sm:$0xff]
    %v88 = vld [vmem:[#allocation4 + $0x70] sm:$0xff]
    %v89 = vld [vmem:[#allocation4 + $0x78] sm:$0xff]
    %v90 = vld [vmem:[%s4] sm:$0x1]
    %v92 = vperm.slane %v90, 0
    %94 = vmatpush.msra.mxu0 %v89
    %95 = vmatpush.msra.mxu0 %v88
    %96 = vmatpush.msra.mxu0 %v87
    %97 = vmatpush.msra.mxu0 %v86
    %98 = vmatpush.msra.mxu0 %v85
    %99 = vmatpush.msra.mxu0 %v84
    %100 = vmatpush.msra.mxu0 %v83
    %101 = vmatpush.msra.mxu0 %v82
    %102 = vmatpush.msra.mxu0 %v81
    %103 = vmatpush.msra.mxu0 %v80
    %104 = vmatpush.msra.mxu0 %v79
    %105 = vmatpush.msra.mxu0 %v78
    %106 = vmatpush.msra.mxu0 %v77
    %107 = vmatpush.msra.mxu0 %v76
    %108 = vmatpush.msra.mxu0 %v75
    %109 = vmatpush.msra.mxu0 %v74
    %110 = vmatmul.f32.gmra.mxu0 %v73
    %v111 = vpop.f32.mrf.mxu0
    %v112 = vadd.f32 %v92, %v111
    %113 = vdwg.mxu0
    %114 = vst [vmem:[#allocation2] sm:$0xff] %v112
    %v115 = vld [vmem:[#allocation7] sm:$0xff]
    %v116 = vld [vmem:[#allocation7 + $0x8] sm:$0xff]
    %v117 = vld [vmem:[#allocation7 + $0x10] sm:$0xff]
    %v118 = vld [vmem:[#allocation7 + $0x18] sm:$0xff]
    %v119 = vld [vmem:[#allocation7 + $0x20] sm:$0xff]
    %v120 = vld [vmem:[#allocation7 + $0x28] sm:$0xff]
    %v121 = vld [vmem:[#allocation7 + $0x30] sm:$0xff]
    %v122 = vld [vmem:[#allocation7 + $0x38] sm:$0xff]
    %v123 = vld [vmem:[#allocation7 + $0x40] sm:$0xff]
    %v124 = vld [vmem:[#allocation7 + $0x48] sm:$0xff]
    %v125 = vld [vmem:[#allocation7 + $0x50] sm:$0xff]
    %v126 = vld [vmem:[#allocation7 + $0x58] sm:$0xff]
    %v127 = vld [vmem:[#allocation7 + $0x60] sm:$0xff]
    %v128 = vld [vmem:[#allocation7 + $0x68] sm:$0xff]
    %v129 = vld [vmem:[#allocation7 + $0x70] sm:$0xff]
    %v130 = vld [vmem:[#allocation7 + $0x78] sm:$0xff]
    %v131 = vld [vmem:[#allocation2] sm:$0xff]
    %132 = vmatpush.msra.mxu0 %v130
    %133 = vmatpush.msra.mxu0 %v129
    %134 = vmatpush.msra.mxu0 %v128
    %135 = vmatpush.msra.mxu0 %v127
    %136 = vmatpush.msra.mxu0 %v126
    %137 = vmatpush.msra.mxu0 %v125
    %138 = vmatpush.msra.mxu0 %v124
    %139 = vmatpush.msra.mxu0 %v123
    %140 = vmatpush.msra.mxu0 %v122
    %141 = vmatpush.msra.mxu0 %v121
    %142 = vmatpush.msra.mxu0 %v120
    %143 = vmatpush.msra.mxu0 %v119
    %144 = vmatpush.msra.mxu0 %v118
    %145 = vmatpush.msra.mxu0 %v117
    %146 = vmatpush.msra.mxu0 %v116
    %147 = vmatpush.msra.mxu0 %v115
    %148 = vmatmul.f32.gmra.mxu0 0.0
    %v149 = vpop.f32.mrf.mxu0
    %v150 = vadd.f32 %v131, %v149
    %151 = vdwg.mxu0
    %v152 = vtanh.pop %v150
    %v154 = vrot.slane %v131, 1
    %156 = vmatpush.msra.mxu0 %v130
    %157 = vmatpush.msra.mxu0 %v129
    %158 = vmatpush.msra.mxu0 %v128
    %159 = vmatpush.msra.mxu0 %v127
    %160 = vmatpush.msra.mxu0 %v126
    %161 = vmatpush.msra.mxu0 %v125
    %162 = vmatpush.msra.mxu0 %v124
    %163 = vmatpush.msra.mxu0 %v123
    %164 = vmatpush.msra.mxu0 %v122
    %165 = vmatpush.msra.mxu0 %v121
    %166 = vmatpush.msra.mxu0 %v120
    %167 = vmatpush.msra.mxu0 %v119
    %168 = vmatpush.msra.mxu0 %v118
    %169 = vmatpush.msra.mxu0 %v117
    %170 = vmatpush.msra.mxu0 %v116
    %171 = vmatpush.msra.mxu0 %v115
    %172 = vmatmul.f32.gmra.mxu0 %v152
    %v173 = vpop.f32.mrf.mxu0
    %v174 = vadd.f32 %v154, %v173
    %175 = vdwg.mxu0
    %v176 = vtanh.pop %v174
    %v177 = vrot.slane %v131, 2
    %179 = vmatpush.msra.mxu0 %v130
    %180 = vmatpush.msra.mxu0 %v129
    %181 = vmatpush.msra.mxu0 %v128
    %182 = vmatpush.msra.mxu0 %v127
    %183 = vmatpush.msra.mxu0 %v126
    %184 = vmatpush.msra.mxu0 %v125
    %185 = vmatpush.msra.mxu0 %v124
    %186 = vmatpush.msra.mxu0 %v123
    %187 = vmatpush.msra.mxu0 %v122
    %188 = vmatpush.msra.mxu0 %v121
    %189 = vmatpush.msra.mxu0 %v120
    %190 = vmatpush.msra.mxu0 %v119
    %191 = vmatpush.msra.mxu0 %v118
    %192 = vmatpush.msra.mxu0 %v117
    %193 = vmatpush.msra.mxu0 %v116
    %194 = vmatpush.msra.mxu0 %v115
    %195 = vmatmul.f32.gmra.mxu0 %v176
    %v196 = vpop.f32.mrf.mxu0
    %v197 = vadd.f32 %v177, %v196
    %198 = vdwg.mxu0
    %v199 = vtanh.pop %v197
    %v200 = vrot.slane %v131, 3
    %202 = vmatpush.msra.mxu0 %v130
    %203 = vmatpush.msra.mxu0 %v129
    %204 = vmatpush.msra.mxu0 %v128
    %205 = vmatpush.msra.mxu0 %v127
    %206 = vmatpush.msra.mxu0 %v126
    %207 = vmatpush.msra.mxu0 %v125
    %208 = vmatpush.msra.mxu0 %v124
    %209 = vmatpush.msra.mxu0 %v123
    %210 = vmatpush.msra.mxu0 %v122
    %211 = vmatpush.msra.mxu0 %v121
    %212 = vmatpush.msra.mxu0 %v120
    %213 = vmatpush.msra.mxu0 %v119
    %214 = vmatpush.msra.mxu0 %v118
    %215 = vmatpush.msra.mxu0 %v117
    %216 = vmatpush.msra.mxu0 %v116
    %217 = vmatpush.msra.mxu0 %v115
    %218 = vmatmul.f32.gmra.mxu0 %v199
    %v219 = vpop.f32.mrf.mxu0
    %v220 = vadd.f32 %v200, %v219
    %221 = vdwg.mxu0
    %v222 = vtanh.pop %v220
    %v223 = vrot.slane %v131, 4
    %225 = vmatpush.msra.mxu0 %v130
    %226 = vmatpush.msra.mxu0 %v129
    %227 = vmatpush.msra.mxu0 %v128
    %228 = vmatpush.msra.mxu0 %v127
    %229 = vmatpush.msra.mxu0 %v126
    %230 = vmatpush.msra.mxu0 %v125
    %231 = vmatpush.msra.mxu0 %v124
    %232 = vmatpush.msra.mxu0 %v123
    %233 = vmatpush.msra.mxu0 %v122
    %234 = vmatpush.msra.mxu0 %v121
    %235 = vmatpush.msra.mxu0 %v120
    %236 = vmatpush.msra.mxu0 %v119
    %237 = vmatpush.msra.mxu0 %v118
    %238 = vmatpush.msra.mxu0 %v117
    %239 = vmatpush.msra.mxu0 %v116
    %240 = vmatpush.msra.mxu0 %v115
    %241 = vmatmul.f32.gmra.mxu0 %v222
    %v242 = vpop.f32.mrf.mxu0
    %v243 = vadd.f32 %v223, %v242
    %244 = vdwg.mxu0
    %v245 = vtanh.pop %v243
    %v246 = vrot.slane %v131, 5
    %248 = vmatpush.msra.mxu0 %v130
    %249 = vmatpush.msra.mxu0 %v129
    %250 = vmatpush.msra.mxu0 %v128
    %251 = vmatpush.msra.mxu0 %v127
    %252 = vmatpush.msra.mxu0 %v126
    %253 = vmatpush.msra.mxu0 %v125
    %254 = vmatpush.msra.mxu0 %v124
    %255 = vmatpush.msra.mxu0 %v123
    %256 = vmatpush.msra.mxu0 %v122
    %257 = vmatpush.msra.mxu0 %v121
    %258 = vmatpush.msra.mxu0 %v120
    %259 = vmatpush.msra.mxu0 %v119
    %260 = vmatpush.msra.mxu0 %v118
    %261 = vmatpush.msra.mxu0 %v117
    %262 = vmatpush.msra.mxu0 %v116
    %263 = vmatpush.msra.mxu0 %v115
    %264 = vmatmul.f32.gmra.mxu0 %v245
    %v265 = vpop.f32.mrf.mxu0
    %v266 = vadd.f32 %v246, %v265
    %267 = vdwg.mxu0
    %v268 = vtanh.pop %v266
    %v269 = vrot.slane %v131, 6
    %271 = vmatpush.msra.mxu0 %v130
    %272 = vmatpush.msra.mxu0 %v129
    %273 = vmatpush.msra.mxu0 %v128
    %274 = vmatpush.msra.mxu0 %v127
    %275 = vmatpush.msra.mxu0 %v126
    %276 = vmatpush.msra.mxu0 %v125
    %277 = vmatpush.msra.mxu0 %v124
    %278 = vmatpush.msra.mxu0 %v123
    %279 = vmatpush.msra.mxu0 %v122
    %280 = vmatpush.msra.mxu0 %v121
    %281 = vmatpush.msra.mxu0 %v120
    %282 = vmatpush.msra.mxu0 %v119
    %283 = vmatpush.msra.mxu0 %v118
    %284 = vmatpush.msra.mxu0 %v117
    %285 = vmatpush.msra.mxu0 %v116
    %286 = vmatpush.msra.mxu0 %v115
    %287 = vmatmul.f32.gmra.mxu0 %v268
    %v288 = vpop.f32.mrf.mxu0
    %v289 = vadd.f32 %v269, %v288
    %290 = vdwg.mxu0
    %v291 = vtanh.pop %v289
    %v292 = vrot.slane %v131, 7
    %294 = vmatpush.msra.mxu0 %v130
    %295 = vmatpush.msra.mxu0 %v129
    %296 = vmatpush.msra.mxu0 %v128
    %297 = vmatpush.msra.mxu0 %v127
    %298 = vmatpush.msra.mxu0 %v126
    %299 = vmatpush.msra.mxu0 %v125
    %300 = vmatpush.msra.mxu0 %v124
    %301 = vmatpush.msra.mxu0 %v123
    %302 = vmatpush.msra.mxu0 %v122
    %303 = vmatpush.msra.mxu0 %v121
    %304 = vmatpush.msra.mxu0 %v120
    %305 = vmatpush.msra.mxu0 %v119
    %306 = vmatpush.msra.mxu0 %v118
    %307 = vmatpush.msra.mxu0 %v117
    %308 = vmatpush.msra.mxu0 %v116
    %309 = vmatpush.msra.mxu0 %v115
    %310 = vmatmul.f32.gmra.mxu0 %v291
    %v311 = vpop.f32.mrf.mxu0
    %v312 = vadd.f32 %v292, %v311
    %313 = vdwg.mxu0
    %v314 = vtanh.pop %v312
    %v316 = vrot.slane %v176, 7
    %v319 = vrot.slane %v199, 6
    %v322 = vrot.slane %v222, 5
    %v325 = vrot.slane %v245, 4
    %v328 = vrot.slane %v268, 3
    %v331 = vrot.slane %v291, 2
    %v334 = vrot.slane %v314, 1
    %vm336 = vcmask 1040384
    %v337 = vsel %vm336, %v152, %v316
    %vm338 = vcmask 1041408
    %v339 = vsel %vm338, %v337, %v319
    %vm340 = vcmask 1042432
    %v341 = vsel %vm340, %v339, %v322
    %vm342 = vcmask 1043456
    %v343 = vsel %vm342, %v341, %v325
    %vm344 = vcmask 1044480
    %v345 = vsel %vm344, %v343, %v328
    %vm346 = vcmask 1045504
    %v347 = vsel %vm346, %v345, %v331
    %vm348 = vcmask 1046528
    %v349 = vsel %vm348, %v347, %v334
    %350 = vst [vmem:[#allocation3] sm:$0xff] %v349
    %351 = vst [vmem:[%s6] sm:$0x1] %v314
    %v352 = vld [vmem:[#allocation3] sm:$0xff]
    %v353 = vld [vmem:[#allocation9] sm:$0xff]
    %v354 = vld [vmem:[#allocation9 + $0x8] sm:$0xff]
    %v355 = vld [vmem:[#allocation9 + $0x10] sm:$0xff]
    %v356 = vld [vmem:[#allocation9 + $0x18] sm:$0xff]
    %v357 = vld [vmem:[#allocation9 + $0x20] sm:$0xff]
    %v358 = vld [vmem:[#allocation9 + $0x28] sm:$0xff]
    %v359 = vld [vmem:[#allocation9 + $0x30] sm:$0xff]
    %v360 = vld [vmem:[#allocation9 + $0x38] sm:$0xff]
    %v361 = vld [vmem:[#allocation9 + $0x40] sm:$0xff]
    %v362 = vld [vmem:[#allocation9 + $0x48] sm:$0xff]
    %v363 = vld [vmem:[#allocation9 + $0x50] sm:$0xff]
    %v364 = vld [vmem:[#allocation9 + $0x58] sm:$0xff]
    %v365 = vld [vmem:[#allocation9 + $0x60] sm:$0xff]
    %v366 = vld [vmem:[#allocation9 + $0x68] sm:$0xff]
    %v367 = vld [vmem:[#allocation9 + $0x70] sm:$0xff]
    %v368 = vld [vmem:[#allocation9 + $0x78] sm:$0xff]
    %v369 = vld [vmem:[%s5] sm:$0x1]
    %v371 = vperm.slane %v369, 0
    %373 = vmatpush.msra.mxu0 %v368
    %374 = vmatpush.msra.mxu0 %v367
    %375 = vmatpush.msra.mxu0 %v366
    %376 = vmatpush.msra.mxu0 %v365
    %377 = vmatpush.msra.mxu0 %v364
    %378 = vmatpush.msra.mxu0 %v363
    %379 = vmatpush.msra.mxu0 %v362
    %380 = vmatpush.msra.mxu0 %v361
    %381 = vmatpush.msra.mxu0 %v360
    %382 = vmatpush.msra.mxu0 %v359
    %383 = vmatpush.msra.mxu0 %v358
    %384 = vmatpush.msra.mxu0 %v357
    %385 = vmatpush.msra.mxu0 %v356
    %386 = vmatpush.msra.mxu0 %v355
    %387 = vmatpush.msra.mxu0 %v354
    %388 = vmatpush.msra.mxu0 %v353
    %389 = vmatmul.f32.gmra.mxu0 %v352
    %v390 = vpop.f32.mrf.mxu0
    %v391 = vadd.f32 %v371, %v390
    %392 = vdwg.mxu0
    %393 = vmax.xlane.f32.xlu0 %v391
    %v394 = vpop.xlane.xlu0 %393
    %v395 = vsub.f32 %v391, %v394
    %v396 = vmul.f32 %v395, 1.442695
    %v397 = vpow.pop %v396
    %398 = vadd.xlane.f32.xlu0 %v397
    %v399 = vpop.xlane.xlu0 %398
    %v400 = vrcp.pop %v399
    %v401 = vmul.f32 %v397, %v400
    %402 = vst [vmem:[#allocation10] sm:$0xff] %v401
    // Predicated region
    $region38: #{rnn_forward.1} parent=1 // pred_check
      _
    $region39: #{rnn_forward.1} parent=1 // pred_check_branch
      %404 = sbr.rel (0) target = $region41
    $region40: #{rnn_forward.1} parent=1 // pred_region
      _
    $region41: #{rnn_forward.1} parent=1 // pred_fallthru
      _
    // Predicated region
    $region42: #{rnn_forward.1} parent=1 // pred_check
      _
    $region43: #{rnn_forward.1} parent=1 // pred_check_branch
      %406 = sbr.rel (0) target = $region45
    $region44: #{rnn_forward.1} parent=1 // pred_region
      %408 = vsyncadd [#allocation6], 0
      %s410 = sshll.u32 [#allocation10], 4
      %s411 = int_to_ptr.vmem [resolvable:$true] %s410
      %s412 = sshll.u32 %s7, 4
      %s413 = int_to_ptr.hbm [resolvable:$true] %s412
      %415 = dma.vmem_to_hbm [thread:$0]  %s411, 128, %s413, [#allocation6]
    $region45: #{rnn_forward.1} parent=1 // pred_fallthru
      _
    // Predicated region
    $region46: #{rnn_forward.1} parent=1 // pred_check
      _
    $region47: #{rnn_forward.1} parent=1 // pred_check_branch
      %417 = sbr.rel (0) target = $region49
    $region48: #{rnn_forward.1} parent=1 // pred_region
      _
    $region49: #{rnn_forward.1} parent=1 // pred_fallthru
      _
    // Predicated region
    $region50: #{rnn_forward.1} parent=1 // pred_check
      _
    $region51: #{rnn_forward.1} parent=1 // pred_check_branch
      %419 = sbr.rel (0) target = $region53
    $region52: #{rnn_forward.1} parent=1 // pred_region
      %421 = dma.done [#allocation6], 128
    $region53: #{rnn_forward.1} parent=1 // pred_fallthru
      _
    %422 = vsyncpa [#allocation5], 1
    %423 = vsyncpa [#allocation8], 1
    %424 = vsyncpa [#allocation6], 1

</llo_original>
